<compile_context>
chip_gen: v6e
topology: v6e:2x2x1
jax: 0.10.0
libtpu: 0.0.40
codegen_flags: <defaults>
</compile_context>

<pallas_src>
import jax
import jax.numpy as jnp
from jax.experimental import pallas as pl
from jax.experimental.pallas import tpu as pltpu

_EPS = 1e-5  # nn.LayerNorm default


# ---------------------------------------------------------------------------
# Kernels
# ---------------------------------------------------------------------------
def _layernorm_kernel(x_ref, gamma_ref, beta_ref, o_ref):
    # x_ref: (block_rows, D) tile; gamma/beta: (1, D); LayerNorm over axis -1.
    x = x_ref[...].astype(jnp.float32)
    mean = jnp.mean(x, axis=-1, keepdims=True)
    centered = x - mean
    var = jnp.mean(centered * centered, axis=-1, keepdims=True)
    inv = jax.lax.rsqrt(var + _EPS)
    y = centered * inv * gamma_ref[...].astype(jnp.float32) + beta_ref[...].astype(jnp.float32)
    o_ref[...] = y.astype(o_ref.dtype)


def _layernorm_matmul_kernel(x_ref, gamma_ref, beta_ref, w_ref, b_ref, o_ref):
    # Fused: LayerNorm a (block_rows, D) tile, then project with resident (D, E) W.
    x = x_ref[...].astype(jnp.float32)
    mean = jnp.mean(x, axis=-1, keepdims=True)
    centered = x - mean
    var = jnp.mean(centered * centered, axis=-1, keepdims=True)
    inv = jax.lax.rsqrt(var + _EPS)
    y = centered * inv * gamma_ref[...].astype(jnp.float32) + beta_ref[...].astype(jnp.float32)
    acc = jnp.dot(y.astype(w_ref.dtype), w_ref[...], preferred_element_type=jnp.float32)
    acc = acc + b_ref[...].astype(jnp.float32)
    o_ref[...] = acc.astype(o_ref.dtype)


# ---------------------------------------------------------------------------
# Tile-size / VMEM-budget helpers
# ---------------------------------------------------------------------------
def _sublane_multiple(dtype):
    itemsize = jnp.dtype(dtype).itemsize
    return {4: 8, 2: 16, 1: 32}.get(itemsize, 8)


def _round_up(v, m):
    return ((v + m - 1) // m) * m


def _pick_block_rows(rows, d, dtype, block_rows=None):
    sub = _sublane_multiple(dtype)
    if block_rows is None:
        # Memory-bound kernel: take the largest row tile whose f32-equivalent
        # slab stays within ~4 MiB, capped at 2048 rows (measured: multi-MiB
        # tiles reach ~85% of HBM roofline; 8-row tiles stay below 30%).
        budget_bytes = 4 * 1024 * 1024
        block_rows = max(sub, budget_bytes // max(1, d * 4))
        block_rows = min(block_rows, 2048)
    block_rows = max(sub, (block_rows // sub) * sub)

    padded_full = _round_up(rows, sub)
    if block_rows >= padded_full:
        if padded_full >= 4 * sub:
            # Enough work: split into >=2 tiles so the "parallel" grid axis can
            # shard across v7x's two TensorCores.
            block_rows = _round_up(padded_full // 2, sub)
        else:
            block_rows = padded_full
    return block_rows


def _vmem_limit_bytes(block_rows, d_in, d_out, in_itemsize, out_itemsize, extra_bytes=0):
    est = (
        2 * block_rows * d_in * in_itemsize      # double-buffered input tile
        + 2 * block_rows * d_out * out_itemsize  # double-buffered output tile
        + 4 * block_rows * max(d_in, d_out) * 4  # f32 compute intermediates
        + 4 * (d_in + d_out) * 4                 # gamma / beta / bias copies
        + extra_bytes
    )
    # >=32 MiB so large tiles are not rejected; <=48 MiB so the same sizing is
    # safe on v7x (64 MiB physical VMEM) as well as v5e/v6e (128 MiB).
    return int(min(max(est + (2 << 20), 32 << 20), 48 << 20))


# ---------------------------------------------------------------------------
# Wrappers
# ---------------------------------------------------------------------------
def layernorm_pallas(x, gamma, beta, *, block_rows=None):
    """LayerNorm over the last dim of x, rows tiled across a 1-D grid."""
    orig_shape = x.shape
    d = orig_shape[-1]
    x2 = x.reshape(-1, d)
    rows = x2.shape[0]

    block_rows = _pick_block_rows(rows, d, x.dtype, block_rows)
    padded_rows = _round_up(rows, block_rows)
    if padded_rows != rows:
        x2 = jnp.pad(x2, ((0, padded_rows - rows), (0, 0)))
    grid = padded_rows // block_rows

    gamma2 = gamma.reshape(1, d)
    beta2 = beta.reshape(1, d)
    itemsize = jnp.dtype(x.dtype).itemsize
    vmem_limit = _vmem_limit_bytes(block_rows, d, d, itemsize, itemsize)

    out = pl.pallas_call(
        _layernorm_kernel,
        out_shape=jax.ShapeDtypeStruct((padded_rows, d), x.dtype),
        grid_spec=pltpu.PrefetchScalarGridSpec(
            num_scalar_prefetch=0,
            grid=(grid,),
            in_specs=[
                pl.BlockSpec((block_rows, d), lambda i: (i, 0)),
                pl.BlockSpec((1, d), lambda i: (0, 0)),
                pl.BlockSpec((1, d), lambda i: (0, 0)),
            ],
            out_specs=pl.BlockSpec((block_rows, d), lambda i: (i, 0)),
        ),
        compiler_params=pltpu.CompilerParams(
            dimension_semantics=("parallel",),
            vmem_limit_bytes=vmem_limit,
        ),
    )(x2, gamma2, beta2)

    if padded_rows != rows:
        out = out[:rows]
    return out.reshape(orig_shape)


def prenorm_linear_pallas(x, gamma, beta, w, b, *, block_rows=None):
    """Fused LayerNorm(x) @ w + b.  x: (..., D), w: (D, E), b: (E,)."""
    orig_shape = x.shape
    d = orig_shape[-1]
    e = w.shape[1]
    x2 = x.reshape(-1, d)
    rows = x2.shape[0]

    block_rows = _pick_block_rows(rows, max(d, e), x.dtype, block_rows)
    padded_rows = _round_up(rows, block_rows)
    if padded_rows != rows:
        x2 = jnp.pad(x2, ((0, padded_rows - rows), (0, 0)))
    grid = padded_rows // block_rows

    gamma2 = gamma.reshape(1, d)
    beta2 = beta.reshape(1, d)
    b2 = b.reshape(1, e)

    in_item = jnp.dtype(x.dtype).itemsize
    w_bytes = 2 * d * e * jnp.dtype(w.dtype).itemsize
    vmem_limit = _vmem_limit_bytes(block_rows, d, e, in_item, in_item, w_bytes)

    out = pl.pallas_call(
        _layernorm_matmul_kernel,
        out_shape=jax.ShapeDtypeStruct((padded_rows, e), x.dtype),
        grid_spec=pltpu.PrefetchScalarGridSpec(
            num_scalar_prefetch=0,
            grid=(grid,),
            in_specs=[
                pl.BlockSpec((block_rows, d), lambda i: (i, 0)),
                pl.BlockSpec((1, d), lambda i: (0, 0)),
                pl.BlockSpec((1, d), lambda i: (0, 0)),
                pl.BlockSpec((d, e), lambda i: (0, 0)),
                pl.BlockSpec((1, e), lambda i: (0, 0)),
            ],
            out_specs=pl.BlockSpec((block_rows, e), lambda i: (i, 0)),
        ),
        compiler_params=pltpu.CompilerParams(
            dimension_semantics=("parallel",),
            vmem_limit_bytes=vmem_limit,
        ),
    )(x2, gamma2, beta2, w, b2)

    if padded_rows != rows:
        out = out[:rows]
    return out.reshape(orig_shape[:-1] + (e,))


# ---------------------------------------------------------------------------
# Module equivalents
# ---------------------------------------------------------------------------
class Linear:
    """Minimal linear layer y = x @ w + b (stands in for a user-supplied fn)."""

    def __init__(self, w, b):
        self.w = w
        self.b = b

    def __call__(self, x):
        return jnp.einsum("...d,de->...e", x, self.w) + self.b


class PreNorm:
    """JAX/Pallas equivalent of the PyTorch PreNorm module.

    forward(x, **kwargs) == fn(LayerNorm(x), **kwargs)
    """

    def __init__(self, dim, fn):
        self.dim = dim
        self.fn = fn
        # nn.LayerNorm default init: weight = ones, bias = zeros.
        self.gamma = jnp.ones((dim,), dtype=jnp.float32)
        self.beta = jnp.zeros((dim,), dtype=jnp.float32)

    def __call__(self, x, **kwargs):
        # Common case: fn is a plain projection -> fuse LayerNorm + matmul into
        # one Pallas kernel (saves a full HBM round trip of the normed tensor).
        if isinstance(self.fn, Linear) and not kwargs:
            d, e = self.fn.w.shape
            if d * e * jnp.dtype(self.fn.w.dtype).itemsize <= (8 << 20):
                return prenorm_linear_pallas(x, self.gamma, self.beta, self.fn.w, self.fn.b)
        # General case: Pallas LayerNorm, then arbitrary user fn as JAX glue.
        normed = layernorm_pallas(x, self.gamma, self.beta)
        return self.fn(normed, **kwargs)


# ---------------------------------------------------------------------------
# Demo / self-check
# ---------------------------------------------------------------------------
if __name__ == "__main__":
    B, N, D = 2, 8, 32
    key = jax.random.PRNGKey(0)
    kx, kw, kb = jax.random.split(key, 3)
    x = jax.random.normal(kx, (B, N, D), dtype=jnp.float32)
    W = jax.random.normal(kw, (D, D), dtype=jnp.float32) * 0.02
    bvec = jax.random.normal(kb, (D,), dtype=jnp.float32) * 0.01
    fn = Linear(W, bvec)

    prenorm = PreNorm(D, fn)
    out = jax.block_until_ready(prenorm(x))      # fused LayerNorm + matmul path
    assert out.shape == (B, N, D)

    # Reference for the fused path (pure JAX). Tolerance is relaxed slightly to
    # absorb MXU-pass-count differences between the in-kernel dot and the XLA
    # einsum; structural bugs would produce errors orders of magnitude larger.
    mean = jnp.mean(x, axis=-1, keepdims=True)
    var = jnp.mean((x - mean) ** 2, axis=-1, keepdims=True)
    normed_ref = (x - mean) * jax.lax.rsqrt(var + _EPS) * prenorm.gamma + prenorm.beta
    ref = fn(normed_ref)
    assert jnp.allclose(out, ref, atol=2e-3, rtol=2e-3)

    # Also exercise the general (unfused) path: arbitrary fn + a row count that
    # is not a multiple of the tile (tail handled by padding in the wrapper).
    x_odd = jax.random.normal(jax.random.PRNGKey(1), (3, 5, D), dtype=jnp.float32)
    prenorm_gelu = PreNorm(D, jax.nn.gelu)
    out2 = jax.block_until_ready(prenorm_gelu(x_odd))
    mean2 = jnp.mean(x_odd, axis=-1, keepdims=True)
    var2 = jnp.mean((x_odd - mean2) ** 2, axis=-1, keepdims=True)
    ref2 = jax.nn.gelu((x_odd - mean2) * jax.lax.rsqrt(var2 + _EPS))
    assert out2.shape == x_odd.shape
    assert jnp.allclose(out2, ref2, atol=1e-5, rtol=1e-5)

    print("KERNEL_OK")
</pallas_src>

<mosaic_0001>
module attributes {stable_mosaic.version = 11 : i64} {
  func.func @_layernorm_matmul_kernel(%arg0: i32, %arg1: memref<16x32xf32, #tpu.memory_space<vmem>>, %arg2: memref<1x32xf32, #tpu.memory_space<vmem>>, %arg3: memref<1x32xf32, #tpu.memory_space<vmem>>, %arg4: memref<32x32xf32, #tpu.memory_space<vmem>>, %arg5: memref<1x32xf32, #tpu.memory_space<vmem>>, %arg6: memref<16x32xf32, #tpu.memory_space<vmem>>) attributes {dimension_semantics = [#tpu.dimension_semantics<parallel>], iteration_bounds = array<i64: 1>, scalar_prefetch = 0 : i64, scratch_operands = 0 : i64, tpu.core_type = #tpu.core_type<tc>, window_params = [{transform_indices = @transform_0, window_bounds = array<i64: 16, 32>}, {pipeline_mode = #tpu.pipeline_mode<synchronous>, transform_indices = @transform_1, window_bounds = array<i64: 1, 32>}, {pipeline_mode = #tpu.pipeline_mode<synchronous>, transform_indices = @transform_2, window_bounds = array<i64: 1, 32>}, {pipeline_mode = #tpu.pipeline_mode<synchronous>, transform_indices = @transform_3, window_bounds = array<i64: 32, 32>}, {pipeline_mode = #tpu.pipeline_mode<synchronous>, transform_indices = @transform_4, window_bounds = array<i64: 1, 32>}, {transform_indices = @transform_5, window_bounds = array<i64: 16, 32>}]} {
    %c0 = arith.constant 0 : index
    %c0_0 = arith.constant 0 : index
    %0 = vector.load %arg1[%c0, %c0_0] : memref<16x32xf32, #tpu.memory_space<vmem>>, vector<16x32xf32>
    %cst = arith.constant dense<0.000000e+00> : vector<16xf32>
    %1 = vector.multi_reduction <add>, %0, %cst [1] : vector<16x32xf32> to vector<16xf32>
    %2 = vector.shape_cast %1 : vector<16xf32> to vector<16x1xf32>
    %cst_1 = arith.constant 3.200000e+01 : f32
    %3 = vector.broadcast %cst_1 : f32 to vector<16x1xf32>
    %4 = arith.divf %2, %3 : vector<16x1xf32>
    %5 = vector.broadcast %4 : vector<16x1xf32> to vector<16x32xf32>
    %6 = arith.subf %0, %5 : vector<16x32xf32>
    %7 = arith.mulf %6, %6 : vector<16x32xf32>
    %cst_2 = arith.constant dense<0.000000e+00> : vector<16xf32>
    %8 = vector.multi_reduction <add>, %7, %cst_2 [1] : vector<16x32xf32> to vector<16xf32>
    %9 = vector.shape_cast %8 : vector<16xf32> to vector<16x1xf32>
    %cst_3 = arith.constant 3.200000e+01 : f32
    %10 = vector.broadcast %cst_3 : f32 to vector<16x1xf32>
    %11 = arith.divf %9, %10 : vector<16x1xf32>
    %cst_4 = arith.constant 9.99999974E-6 : f32
    %12 = vector.broadcast %cst_4 : f32 to vector<16x1xf32>
    %13 = arith.addf %11, %12 : vector<16x1xf32>
    %14 = math.rsqrt %13 : vector<16x1xf32>
    %15 = vector.broadcast %14 : vector<16x1xf32> to vector<16x32xf32>
    %16 = arith.mulf %6, %15 : vector<16x32xf32>
    %c0_5 = arith.constant 0 : index
    %c0_6 = arith.constant 0 : index
    %17 = vector.load %arg2[%c0_5, %c0_6] : memref<1x32xf32, #tpu.memory_space<vmem>>, vector<1x32xf32>
    %18 = vector.broadcast %17 : vector<1x32xf32> to vector<16x32xf32>
    %19 = arith.mulf %16, %18 : vector<16x32xf32>
    %c0_7 = arith.constant 0 : index
    %c0_8 = arith.constant 0 : index
    %20 = vector.load %arg3[%c0_7, %c0_8] : memref<1x32xf32, #tpu.memory_space<vmem>>, vector<1x32xf32>
    %21 = vector.broadcast %20 : vector<1x32xf32> to vector<16x32xf32>
    %22 = arith.addf %19, %21 : vector<16x32xf32>
    %c0_9 = arith.constant 0 : index
    %c0_10 = arith.constant 0 : index
    %23 = vector.load %arg4[%c0_9, %c0_10] : memref<32x32xf32, #tpu.memory_space<vmem>>, vector<32x32xf32>
    %cst_11 = arith.constant dense<0.000000e+00> : vector<16x32xf32>
    %24 = tpu.matmul %22, %23, %cst_11 {dimension_numbers = #tpu.dot_dimension_numbers<[1], [0], [0], [1], [0, 0, 1, 1], [], []>} : vector<16x32xf32>, vector<32x32xf32>, vector<16x32xf32> -> vector<16x32xf32>
    %c0_12 = arith.constant 0 : index
    %c0_13 = arith.constant 0 : index
    %25 = vector.load %arg5[%c0_12, %c0_13] : memref<1x32xf32, #tpu.memory_space<vmem>>, vector<1x32xf32>
    %26 = vector.broadcast %25 : vector<1x32xf32> to vector<16x32xf32>
    %27 = arith.addf %24, %26 : vector<16x32xf32>
    %c0_14 = arith.constant 0 : index
    %c0_15 = arith.constant 0 : index
    %28 = vector.load %arg6[%c0_14, %c0_15] : memref<16x32xf32, #tpu.memory_space<vmem>>, vector<16x32xf32>
    tpu.vector_store %arg6[%c0_14, %c0_15], %27 {strides = array<i32>} : memref<16x32xf32, #tpu.memory_space<vmem>>, vector<16x32xf32>,
    return
  }
  func.func @transform_0(%arg0: i32) -> (i32, i32) {
    %c0_i32 = arith.constant 0 : i32
    %c0_i32_0 = arith.constant 0 : i32
    return %arg0, %c0_i32 : i32, i32
  }
  func.func @transform_1(%arg0: i32) -> (i32, i32) {
    %c0_i32 = arith.constant 0 : i32
    %c0_i32_0 = arith.constant 0 : i32
    %c0_i32_1 = arith.constant 0 : i32
    return %c0_i32, %c0_i32_0 : i32, i32
  }
  func.func @transform_2(%arg0: i32) -> (i32, i32) {
    %c0_i32 = arith.constant 0 : i32
    %c0_i32_0 = arith.constant 0 : i32
    %c0_i32_1 = arith.constant 0 : i32
    return %c0_i32, %c0_i32_0 : i32, i32
  }
  func.func @transform_3(%arg0: i32) -> (i32, i32) {
    %c0_i32 = arith.constant 0 : i32
    %c0_i32_0 = arith.constant 0 : i32
    %c0_i32_1 = arith.constant 0 : i32
    return %c0_i32, %c0_i32_0 : i32, i32
  }
  func.func @transform_4(%arg0: i32) -> (i32, i32) {
    %c0_i32 = arith.constant 0 : i32
    %c0_i32_0 = arith.constant 0 : i32
    %c0_i32_1 = arith.constant 0 : i32
    return %c0_i32, %c0_i32_0 : i32, i32
  }
  func.func @transform_5(%arg0: i32) -> (i32, i32) {
    %c0_i32 = arith.constant 0 : i32
    %c0_i32_0 = arith.constant 0 : i32
    return %arg0, %c0_i32 : i32, i32
  }
}

</mosaic_0001>

<llo_original>
// kernel: tpu_custom_call.1
$region0: #{tpu_custom_call.1}
  #allocation0 [shape = 'u32[]', space=smem, size = 0x4, offset = 0x4, fixed_abs, tag = 'smem constant byte address 0x4 - core index']
  #allocation1 [shape = 'u32[144,128]{1,0:T(1,128)}', space=vmem, size = 0x12000, scoped, tag = 'internal scratch']
  %s0 = inlined_call_operand.hbm [shape: f32[16,32], index: 0, kind: input, shape index: {}]
  %s1 = inlined_call_operand.vmem [shape: f32[1,32], index: 1, kind: input, shape index: {}]
  %s2 = inlined_call_operand.vmem [shape: f32[1,32], index: 2, kind: input, shape index: {}]
  %s3 = inlined_call_operand.hbm [shape: f32[32,32], index: 3, kind: input, shape index: {}]
  %s4 = inlined_call_operand.vmem [shape: f32[1,32], index: 4, kind: input, shape index: {}]
  %s5 = inlined_call_operand.hbm [shape: f32[16,32], index: 5, kind: output, shape index: {}]
  %s6 = sld [smem:[#allocation0]]
  $region38: #{tpu_custom_call.1} parent=0
    _
  %s8 = ssub.s32 1, %s6
  %s9 = scalar_select 0, %s8, %s6
  $region1: #{tpu_custom_call.1} parent=0
    #allocation2 [shape = 'u8[8192]{0}', space=vmem, size = 0x2000, scoped, tag = 'input window, operand 0, single buffered']
    #allocation3 [shape = 's32[1]{0}', space=sflag, size = 0x4, scoped, tag = 'scoped memory for tpu_custom_call.1']
    #allocation4 [shape = 's32[1]{0}', space=sflag, size = 0x4, scoped, tag = 'scoped memory for tpu_custom_call.1']
    #allocation5 [shape = 'u8[16384]{0}', space=vmem, size = 0x4000, scoped, tag = 'input window, operand 3, single buffered']
    #allocation6 [shape = 's32[1]{0}', space=sflag, size = 0x4, scoped, tag = 'scoped memory for tpu_custom_call.1']
    #allocation7 [shape = 'u8[8192]{0}', space=vmem, size = 0x2000, scoped, tag = 'output window, operand 0, single buffered']
    %10 = vsyncpa [#allocation3], 0
    %11 = vsyncpa [#allocation6], 0
    %12 = vsyncpa [#allocation4], 0
    // Predicated region
    $region2: #{tpu_custom_call.1} parent=1 // pred_check
      _
    $region3: #{tpu_custom_call.1} parent=1 // pred_check_branch
      %14 = sbr.rel (0) target = $region5
    $region4: #{tpu_custom_call.1} parent=1 // pred_region
      %s16 = ssub.s32 256, 256
      %17 = vsyncadd [#allocation3], %s16
      %s18 = sshll.u32 [#allocation2], 4
      %s19 = int_to_ptr.vmem [resolvable:$true] %s18
      %24 = dma.hbm_to_vmem [thread:$0]  %s0, 256, %s19, [#allocation3], 128, 128, 8
    $region5: #{tpu_custom_call.1} parent=1 // pred_fallthru
      _
    // Predicated region
    $region6: #{tpu_custom_call.1} parent=1 // pred_check
      _
    $region7: #{tpu_custom_call.1} parent=1 // pred_check_branch
      %26 = sbr.rel (0) target = $region9
    $region8: #{tpu_custom_call.1} parent=1 // pred_region
      _
    $region9: #{tpu_custom_call.1} parent=1 // pred_fallthru
      _
    // Predicated region
    $region10: #{tpu_custom_call.1} parent=1 // pred_check
      _
    $region11: #{tpu_custom_call.1} parent=1 // pred_check_branch
      %28 = sbr.rel (0) target = $region13
    $region12: #{tpu_custom_call.1} parent=1 // pred_region
      _
    $region13: #{tpu_custom_call.1} parent=1 // pred_fallthru
      _
    // Predicated region
    $region14: #{tpu_custom_call.1} parent=1 // pred_check
      _
    $region15: #{tpu_custom_call.1} parent=1 // pred_check_branch
      %30 = sbr.rel (0) target = $region17
    $region16: #{tpu_custom_call.1} parent=1 // pred_region
      %s32 = ssub.s32 512, 512
      %33 = vsyncadd [#allocation6], %s32
      %s34 = sshll.u32 [#allocation5], 4
      %s35 = int_to_ptr.vmem [resolvable:$true] %s34
      %40 = dma.hbm_to_vmem [thread:$0]  %s3, 512, %s35, [#allocation6], 128, 128, 8
    $region17: #{tpu_custom_call.1} parent=1 // pred_fallthru
      _
    // Predicated region
    $region18: #{tpu_custom_call.1} parent=1 // pred_check
      _
    $region19: #{tpu_custom_call.1} parent=1 // pred_check_branch
      %42 = sbr.rel (0) target = $region21
    $region20: #{tpu_custom_call.1} parent=1 // pred_region
      _
    $region21: #{tpu_custom_call.1} parent=1 // pred_fallthru
      _
    // Predicated region
    $region22: #{tpu_custom_call.1} parent=1 // pred_check
      _
    $region23: #{tpu_custom_call.1} parent=1 // pred_check_branch
      %44 = sbr.rel (0) target = $region25
    $region24: #{tpu_custom_call.1} parent=1 // pred_region
      %45 = dma.done [#allocation3], 256
    $region25: #{tpu_custom_call.1} parent=1 // pred_fallthru
      _
    // Predicated region
    $region26: #{tpu_custom_call.1} parent=1 // pred_check
      _
    $region27: #{tpu_custom_call.1} parent=1 // pred_check_branch
      %47 = sbr.rel (0) target = $region29
    $region28: #{tpu_custom_call.1} parent=1 // pred_region
      %48 = dma.done [#allocation6], 512
    $region29: #{tpu_custom_call.1} parent=1 // pred_fallthru
      _
    %v49 = vld [vmem:[#allocation2] sm:$0xff]
    %v50 = vld [vmem:[#allocation2 + $0x8] sm:$0xff]
    %vm51 = vcmask 261120
    %v52 = vsel %vm51, %v49, 0.0
    %53 = vadd.xlane.f32.xlu0 %v52
    %v54 = vpop.xlane.xlu0 %53
    %v55 = vsel %vm51, %v50, 0.0
    %56 = vadd.xlane.f32.xlu0 %v55
    %v57 = vpop.xlane.xlu0 %56
    %v58 = vrcp.pop 32.0
    %v59 = vmul.f32 %v54, %v58
    %v60 = vmul.f32 %v57, %v58
    %v61 = vsub.f32 %v49, %v59
    %v62 = vsub.f32 %v50, %v60
    %v63 = vmul.f32 %v61, %v61
    %v64 = vmul.f32 %v62, %v62
    %v65 = vsel %vm51, %v63, 0.0
    %66 = vadd.xlane.f32.xlu0 %v65
    %v67 = vpop.xlane.xlu0 %66
    %v68 = vsel %vm51, %v64, 0.0
    %69 = vadd.xlane.f32.xlu0 %v68
    %v70 = vpop.xlane.xlu0 %69
    %v71 = vmul.f32 %v67, %v58
    %v72 = vmul.f32 %v70, %v58
    %v73 = vadd.f32 %v71, 1e-05
    %v74 = vadd.f32 %v72, 1e-05
    %v75 = vrsqrt.pop %v73
    %v76 = vrsqrt.pop %v74
    %v77 = vmul.f32 %v61, %v75
    %v78 = vmul.f32 %v62, %v76
    %v79 = vld [vmem:[%s1] sm:$0x1]
    %v81 = vlaneseq
    %v82 = vshrl.u32 %v81, 7
    %v83 = vsub.s32 0, %v82
    %v84 = vrot.slane %v79, %v83
    %v86 = vmul.f32 %v77, %v84
    %v87 = vmul.f32 %v78, %v84
    %v88 = vld [vmem:[%s2] sm:$0x1]
    %v90 = vlaneseq
    %v91 = vshrl.u32 %v90, 7
    %v92 = vsub.s32 0, %v91
    %v93 = vrot.slane %v88, %v92
    %v95 = vadd.f32 %v86, %v93
    %v96 = vadd.f32 %v87, %v93
    %v97 = vld [vmem:[#allocation5] sm:$0xff]
    %v98 = vld [vmem:[#allocation5 + $0x8] sm:$0xff]
    %v99 = vld [vmem:[#allocation5 + $0x10] sm:$0xff]
    %v100 = vld [vmem:[#allocation5 + $0x18] sm:$0xff]
    %v101 = vld [vmem:[%s4] sm:$0x1]
    %v103 = vlaneseq
    %v104 = vshrl.u32 %v103, 7
    %v105 = vsub.s32 0, %v104
    %v106 = vrot.slane %v101, %v105
    %v109 = vsel %vm51, %v95, 0
    %v112 = vsel %vm51, %v96, 0
    %114 = vmatprep.subr.mxu0 0.0
    %115 = vmatpush1.msra.mxu0 0.0
    %116 = vmatprep.subr.mxu0 0.0
    %117 = vmatpush1.msra.mxu0 0.0
    %118 = vmatprep.subr.mxu0 0.0
    %119 = vmatpush1.msra.mxu0 0.0
    %120 = vmatprep.subr.mxu0 0.0
    %121 = vmatpush1.msra.mxu0 0.0
    %122 = vmatprep.subr.mxu0 0.0
    %123 = vmatpush1.msra.mxu0 0.0
    %124 = vmatprep.subr.mxu0 0.0
    %125 = vmatpush1.msra.mxu0 0.0
    %126 = vmatprep.subr.mxu0 0.0
    %127 = vmatpush1.msra.mxu0 0.0
    %128 = vmatprep.subr.mxu0 0.0
    %129 = vmatpush1.msra.mxu0 0.0
    %130 = vmatprep.subr.mxu0 0.0
    %131 = vmatpush1.msra.mxu0 0.0
    %132 = vmatprep.subr.mxu0 0.0
    %133 = vmatpush1.msra.mxu0 0.0
    %134 = vmatprep.subr.mxu0 0.0
    %135 = vmatpush1.msra.mxu0 0.0
    %136 = vmatprep.subr.mxu0 0.0
    %137 = vmatpush1.msra.mxu0 0.0
    %138 = vmatprep.subr.mxu0 0.0
    %139 = vmatpush1.msra.mxu0 %v100
    %140 = vmatprep.subr.mxu0 0.0
    %141 = vmatpush1.msra.mxu0 %v99
    %142 = vmatprep.subr.mxu0 0.0
    %143 = vmatpush1.msra.mxu0 %v98
    %144 = vmatprep.subr.mxu0 0.0
    %145 = vmatpush1.msra.mxu0 %v97
    %146 = vmatprep.subr.mxu0 0.0
    %147 = vmatpush2.msra.mxu0 0.0
    %148 = vmatprep.subr.mxu0 0.0
    %149 = vmatpush2.msra.mxu0 0.0
    %150 = vmatprep.subr.mxu0 0.0
    %151 = vmatpush2.msra.mxu0 0.0
    %152 = vmatprep.subr.mxu0 0.0
    %153 = vmatpush2.msra.mxu0 0.0
    %154 = vmatprep.subr.mxu0 0.0
    %155 = vmatpush2.msra.mxu0 0.0
    %156 = vmatprep.subr.mxu0 0.0
    %157 = vmatpush2.msra.mxu0 0.0
    %158 = vmatprep.subr.mxu0 0.0
    %159 = vmatpush2.msra.mxu0 0.0
    %160 = vmatprep.subr.mxu0 0.0
    %161 = vmatpush2.msra.mxu0 0.0
    %162 = vmatprep.subr.mxu0 0.0
    %163 = vmatpush2.msra.mxu0 0.0
    %164 = vmatprep.subr.mxu0 0.0
    %165 = vmatpush2.msra.mxu0 0.0
    %166 = vmatprep.subr.mxu0 0.0
    %167 = vmatpush2.msra.mxu0 0.0
    %168 = vmatprep.subr.mxu0 0.0
    %169 = vmatpush2.msra.mxu0 0.0
    %170 = vmatprep.subr.mxu0 0.0
    %171 = vmatpush2.msra.mxu0 0.0
    %172 = vmatprep.subr.mxu0 0.0
    %173 = vmatpush2.msra.mxu0 0.0
    %174 = vmatprep.subr.mxu0 0.0
    %175 = vmatpush2.msra.mxu0 0.0
    %176 = vmatprep.subr.mxu0 0.0
    %177 = vmatpush2.msra.mxu0 0.0
    %178 = vmatprep.mubr.f32.mxu0 0.0
    %179 = vmatmul.mubr.f32.gmra.mxu0 %v109
    %v180 = vpop.f32.mrf.mxu0
    %v181 = vadd.f32 %v106, %v180
    %v182 = vpop.f32.mrf.mxu0
    %183 = vmatprep.mubr.f32.mxu0 0.0
    %184 = vmatmul.mubr.f32.gmra.mxu0 %v112
    %v185 = vpop.f32.mrf.mxu0
    %v186 = vadd.f32 %v106, %v185
    %v187 = vpop.f32.mrf.mxu0
    %188 = vdwg.mxu0
    %189 = vst.msk [vmem:[#allocation7] sm:$0xff] %vm51, %v181
    %190 = vst.msk [vmem:[#allocation7 + $0x8] sm:$0xff] %vm51, %v186
    // Predicated region
    $region30: #{tpu_custom_call.1} parent=1 // pred_check
      _
    $region31: #{tpu_custom_call.1} parent=1 // pred_check_branch
      %192 = sbr.rel (0) target = $region33
    $region32: #{tpu_custom_call.1} parent=1 // pred_region
      %s194 = ssub.s32 256, 256
      %195 = vsyncadd [#allocation4], %s194
      %s196 = sshll.u32 [#allocation7], 4
      %s197 = int_to_ptr.vmem [resolvable:$true] %s196
      %202 = dma.vmem_to_hbm [thread:$0]  %s197, 256, %s5, [#allocation4], 128, 128, 8
    $region33: #{tpu_custom_call.1} parent=1 // pred_fallthru
      _
    // Predicated region
    $region34: #{tpu_custom_call.1} parent=1 // pred_check
      _
    $region35: #{tpu_custom_call.1} parent=1 // pred_check_branch
      %204 = sbr.rel (0) target = $region37
    $region36: #{tpu_custom_call.1} parent=1 // pred_region
      %205 = dma.done [#allocation4], 256
    $region37: #{tpu_custom_call.1} parent=1 // pred_fallthru
      _
    %206 = vsyncpa [#allocation3], 1
    %207 = vsyncpa [#allocation6], 1
    %208 = vsyncpa [#allocation4], 1

</llo_original>
